<compile_context>
chip_gen: v5e
topology: v5e:2x2
jax: 0.10.0
libtpu: 0.0.40
codegen_flags: <defaults>
</compile_context>

<pallas_src>
import functools

import jax
import jax.numpy as jnp
from jax import lax
from jax.experimental import pallas as pl
from jax.experimental.pallas import tpu as pltpu
import numpy as np


def _st_kernel(c_lo_ref, c_hi_ref, im_ref, xs_ref, ys_ref, out_ref, *, H, W, KC):
    """One (batch, pixel-tile) grid step.

    c_lo_ref/c_hi_ref : (B, n_pt) int32 in SMEM — chunk range per output tile
    im_ref : (n_kc, C, KC)   bf16 image, pre-split into K-chunks (batch dim squeezed)
    xs_ref : (1, 1, 1, PT)   x sampling coords (padded frame), flipped row order
    ys_ref : (1, 1, 1, PT)   y sampling coords (padded frame), flipped row order
    out_ref: (1, C, PT)      warped + flipped output tile (f32), lane-dense
    """
    C = im_ref.shape[1]
    PT = out_ref.shape[2]

    b = pl.program_id(0)
    t = pl.program_id(1)

    x = xs_ref[0, 0]                 # (1, PT) f32, padded-frame x
    y = ys_ref[0, 0]                 # (1, PT) f32, padded-frame y

    # Corner coordinates clamped inside the *virtual* zero-padded frame
    # [0, W+1] x [0, H+1]; weights use the clamped x1/y1, exactly like the
    # torch reference (including its extrapolation behavior).
    max_x = float(W + 1)
    max_y = float(H + 1)
    x0f = jnp.floor(x)
    y0f = jnp.floor(y)
    x0 = jnp.clip(x0f, 0.0, max_x)
    x1 = jnp.clip(x0f + 1.0, 0.0, max_x)
    y0 = jnp.clip(y0f, 0.0, max_y)
    y1 = jnp.clip(y0f + 1.0, 0.0, max_y)

    dxw = x1 - x
    dyw = y1 - y

    x0i = x0.astype(jnp.int32)
    x1i = x1.astype(jnp.int32)
    y0i = y0.astype(jnp.int32)
    y1i = y1.astype(jnp.int32)

    # Padded coords 1..W / 1..H hit real pixels; 0 and W+1 / H+1 hit the zero
    # border -> fold the border into the weights instead of padding the image.
    vx0 = (x0i >= 1) & (x0i <= W)
    vx1 = (x1i >= 1) & (x1i <= W)
    vy0 = (y0i >= 1) & (y0i <= H)
    vy1 = (y1i >= 1) & (y1i <= H)

    # f32 weight construction (v5e has no bf16 VALU); a single bf16 cast of the
    # combined matrix happens right before the MXU dot.
    wa = jnp.where(vy0 & vx0, dxw * dyw, 0.0)
    wb = jnp.where(vy0 & vx1, dxw * (1.0 - dyw), 0.0)
    wc = jnp.where(vy1 & vx0, (1.0 - dxw) * dyw, 0.0)
    wd = jnp.where(vy1 & vx1, (1.0 - dxw) * (1.0 - dyw), 0.0)

    # Base flat index into the UNPADDED (H*W) image.  Whenever a corner's
    # weight can be nonzero its flat index is exactly base + {0, 1, W, W+1},
    # so one rebased iota + four scalar compares build the combined one-hot.
    base = (y0i - 1) * W + (x0i - 1)            # (1, PT) int32

    out_ref[...] = jnp.zeros_like(out_ref)

    kk0 = lax.broadcasted_iota(jnp.int32, (KC, PT), 0)   # hoisted out of the loop

    def chunk_body(c, carry):
        km = kk0 + (c * KC - base)                        # (KC, PT) int32
        comb = (jnp.where(km == 0, wa, 0.0)
                + jnp.where(km == 1, wb, 0.0)
                + jnp.where(km == W, wc, 0.0)
                + jnp.where(km == W + 1, wd, 0.0))        # (KC, PT) f32
        out_ref[0] += jnp.dot(im_ref[c], comb.astype(jnp.bfloat16),
                              preferred_element_type=jnp.float32)
        return carry

    # Only visit chunks that can hold a sampled corner (bounds from SMEM).
    lax.fori_loop(c_lo_ref[b, t], c_hi_ref[b, t], chunk_body, 0)


def _pixel_tile(P, cap=2048):
    """Largest lane-dense tile (multiple of 128) dividing P, capped; else P."""
    if P <= cap:
        return P
    for t in range(cap - cap % 128, 127, -128):
        if P % t == 0:
            return t
    return P


def _chunk_bounds(xs, ys, H, W, KC, n_kc):
    """Per output tile, the [c_lo, c_hi) range of K-chunks holding any sampled pixel.

    xs, ys: (B, n_pt, PT) padded-frame sampling coordinates.
    Runs in plain XLA (fuses with the coordinate prep) so the kernel's control
    flow is driven by SMEM scalars only.
    """
    K = H * W
    x0f = jnp.floor(xs)
    y0f = jnp.floor(ys)
    x0 = jnp.clip(x0f, 0.0, W + 1.0).astype(jnp.int32)
    x1 = jnp.clip(x0f + 1.0, 0.0, W + 1.0).astype(jnp.int32)
    y0 = jnp.clip(y0f, 0.0, H + 1.0).astype(jnp.int32)
    y1 = jnp.clip(y0f + 1.0, 0.0, H + 1.0).astype(jnp.int32)
    vx0 = (x0 >= 1) & (x0 <= W)
    vx1 = (x1 >= 1) & (x1 <= W)
    vy0 = (y0 >= 1) & (y0 <= H)
    vy1 = (y1 >= 1) & (y1 <= H)
    base = (y0 - 1) * W + (x0 - 1)
    big = jnp.int32(K)
    neg = jnp.int32(-1)
    lo = jnp.minimum(
        jnp.minimum(jnp.where(vy0 & vx0, base, big).min(-1),
                    jnp.where(vy0 & vx1, base + 1, big).min(-1)),
        jnp.minimum(jnp.where(vy1 & vx0, base + W, big).min(-1),
                    jnp.where(vy1 & vx1, base + W + 1, big).min(-1)))
    hi = jnp.maximum(
        jnp.maximum(jnp.where(vy0 & vx0, base, neg).max(-1),
                    jnp.where(vy0 & vx1, base + 1, neg).max(-1)),
        jnp.maximum(jnp.where(vy1 & vx0, base + W, neg).max(-1),
                    jnp.where(vy1 & vx1, base + W + 1, neg).max(-1)))
    c_lo = jnp.clip(lo // KC, 0, n_kc)
    c_hi = jnp.clip(hi // KC + 1, 0, n_kc)
    c_lo = jnp.minimum(c_lo, c_hi)
    return c_lo.astype(jnp.int32), c_hi.astype(jnp.int32)


def spatial_transformer(I, dx_t, dy_t):
    """JAX/Pallas equivalent of SpatialTransformer.forward(I, dx_t, dy_t)."""
    B, C, H, W = I.shape
    P = H * W

    PT = _pixel_tile(P)
    n_pt = P // PT
    # v7x has 2 TensorCores: make sure there are >= 2 grid programs when possible.
    if B * n_pt < 2 and PT % 256 == 0:
        PT //= 2
        n_pt = P // PT

    if P % 256 == 0 and P > 256:
        KC = 256
    elif P % 128 == 0:
        KC = 128
    else:
        KC = P
    n_kc = P // KC

    # Sampling coordinates in the padded frame (the +1), with the final
    # torch.flip(output, [2]) folded in by flipping the row order of the
    # coordinate fields (cheap elementwise; fuses with the mesh add).
    cols = jnp.arange(W, dtype=jnp.float32)
    rows = jnp.arange(H, dtype=jnp.float32)[:, None]
    xs = jnp.flip(dx_t.astype(jnp.float32) + cols + 1.0, axis=1).reshape(B, n_pt, PT)
    ys = jnp.flip(dy_t.astype(jnp.float32) + rows + 1.0, axis=1).reshape(B, n_pt, PT)

    c_lo, c_hi = _chunk_bounds(xs, ys, H, W, KC, n_kc)

    xs4 = xs.reshape(B, n_pt, 1, PT)
    ys4 = ys.reshape(B, n_pt, 1, PT)

    # bf16 image, pre-split into K-chunks along a leading dim so the kernel can
    # index chunks dynamically (cast + transpose fuse into one XLA copy pass).
    im = I.astype(jnp.bfloat16).reshape(B, C, n_kc, KC).transpose(0, 2, 1, 3)

    kernel = functools.partial(_st_kernel, H=H, W=W, KC=KC)

    # VMEM budget: double-buffered blocks + comb/km temporaries, with headroom,
    # capped well under v7x's 64 MiB physical VMEM.
    est = (2 * (C * P * 2 + 2 * PT * 4 + C * PT * 4) + 14 * KC * PT + (2 << 20))
    vmem_limit = int(min(max(2 * est, 8 * 2 ** 20), 48 * 2 ** 20))
    # TODO(synk): for images where the bf16 (C, H*W) block no longer fits VMEM,
    # switch to a K-chunked grid axis with a scratch accumulator instead of a
    # per-batch resident image.

    out_flat = pl.pallas_call(
        kernel,
        out_shape=jax.ShapeDtypeStruct((B, C, P), jnp.float32),
        grid_spec=pltpu.PrefetchScalarGridSpec(
            num_scalar_prefetch=2,
            grid=(B, n_pt),
            in_specs=[
                pl.BlockSpec((None, n_kc, C, KC), lambda b, t, lo, hi: (b, 0, 0, 0)),
                pl.BlockSpec((1, 1, 1, PT), lambda b, t, lo, hi: (b, t, 0, 0)),
                pl.BlockSpec((1, 1, 1, PT), lambda b, t, lo, hi: (b, t, 0, 0)),
            ],
            out_specs=pl.BlockSpec((1, C, PT), lambda b, t, lo, hi: (b, 0, t)),
        ),
        compiler_params=pltpu.CompilerParams(
            dimension_semantics=("parallel", "parallel"),
            vmem_limit_bytes=vmem_limit),
    )(c_lo, c_hi, im, xs4, ys4)

    # Free reshape (same memory layout); flip already fused into the kernel.
    return out_flat.reshape(B, C, H, W)


def reference(I, dx_t, dy_t):
    """Pure-JAX reference of the (batch-consistent) PyTorch forward."""
    B, C, H, W = I.shape
    Hp, Wp = H + 2, W + 2
    Ip = jnp.pad(I.astype(jnp.float32), ((0, 0), (0, 0), (1, 1), (1, 1)))
    cols = jnp.arange(W, dtype=jnp.float32)[None, :]
    rows = jnp.arange(H, dtype=jnp.float32)[:, None]
    x = dx_t + cols + 1.0
    y = dy_t + rows + 1.0
    x0 = jnp.clip(jnp.floor(x), 0, Wp - 1)
    x1 = jnp.clip(jnp.floor(x) + 1, 0, Wp - 1)
    y0 = jnp.clip(jnp.floor(y), 0, Hp - 1)
    y1 = jnp.clip(jnp.floor(y) + 1, 0, Hp - 1)
    dxw, dyw = x1 - x, y1 - y
    wa = dxw * dyw
    wb = dxw * (1 - dyw)
    wc = (1 - dxw) * dyw
    wd = (1 - dxw) * (1 - dyw)
    bi = jnp.arange(B)[:, None, None, None]
    ci = jnp.arange(C)[None, :, None, None]

    def g(yi, xi):
        return Ip[bi, ci, yi.astype(jnp.int32)[:, None], xi.astype(jnp.int32)[:, None]]

    out = (wa[:, None] * g(y0, x0) + wb[:, None] * g(y0, x1)
           + wc[:, None] * g(y1, x0) + wd[:, None] * g(y1, x1))
    return jnp.flip(out, axis=2)


if __name__ == "__main__":
    key = jax.random.PRNGKey(0)
    B, C, H, W = 2, 4, 16, 16
    k1, k2, k3 = jax.random.split(key, 3)
    I = jax.random.normal(k1, (B, C, H, W), dtype=jnp.float32)
    dx_t = 2.0 * jax.random.normal(k2, (B, H, W), dtype=jnp.float32)
    dy_t = 2.0 * jax.random.normal(k3, (B, H, W), dtype=jnp.float32)

    out = jax.block_until_ready(spatial_transformer(I, dx_t, dy_t))
    ref = jax.block_until_ready(reference(I, dx_t, dy_t))
    assert out.shape == (B, C, H, W)
    np.testing.assert_allclose(np.asarray(out), np.asarray(ref),
                               rtol=2e-2, atol=2e-2)
    print("KERNEL_OK")
</pallas_src>

<mosaic_0001>
module attributes {stable_mosaic.version = 11 : i64} {
  func.func @_st_kernel(%arg0: i32, %arg1: i32, %arg2: memref<2x1xi32, #tpu.memory_space<smem>>, %arg3: memref<2x1xi32, #tpu.memory_space<smem>>, %arg4: memref<1x2x4x128xbf16, #tpu.memory_space<vmem>>, %arg5: memref<1x1x1x256xf32, #tpu.memory_space<vmem>>, %arg6: memref<1x1x1x256xf32, #tpu.memory_space<vmem>>, %arg7: memref<1x4x256xf32, #tpu.memory_space<vmem>>) attributes {dimension_semantics = [#tpu.dimension_semantics<parallel>, #tpu.dimension_semantics<parallel>], iteration_bounds = array<i64: 2, 1>, scalar_prefetch = 2 : i64, scratch_operands = 0 : i64, tpu.core_type = #tpu.core_type<tc>, window_params = [{transform_indices = @transform_0, window_bounds = array<i64: 1, 2, 4, 128>}, {transform_indices = @transform_1, window_bounds = array<i64: 1, 1, 1, 256>}, {transform_indices = @transform_2, window_bounds = array<i64: 1, 1, 1, 256>}, {transform_indices = @transform_3, window_bounds = array<i64: 1, 4, 256>}]} {
    %c0 = arith.constant 0 : index
    %c0_0 = arith.constant 0 : index
    %c0_1 = arith.constant 0 : index
    %c0_2 = arith.constant 0 : index
    %0 = vector.load %arg5[%c0, %c0_0, %c0_1, %c0_2] : memref<1x1x1x256xf32, #tpu.memory_space<vmem>>, vector<1x1x1x256xf32>
    %1 = vector.shape_cast %0 : vector<1x1x1x256xf32> to vector<1x256xf32>
    %c0_3 = arith.constant 0 : index
    %c0_4 = arith.constant 0 : index
    %c0_5 = arith.constant 0 : index
    %c0_6 = arith.constant 0 : index
    %2 = vector.load %arg6[%c0_3, %c0_4, %c0_5, %c0_6] : memref<1x1x1x256xf32, #tpu.memory_space<vmem>>, vector<1x1x1x256xf32>
    %3 = vector.shape_cast %2 : vector<1x1x1x256xf32> to vector<1x256xf32>
    %4 = math.floor %1 : vector<1x256xf32>
    %5 = math.floor %3 : vector<1x256xf32>
    %cst = arith.constant 0.000000e+00 : f32
    %cst_7 = arith.constant 1.700000e+01 : f32
    %6 = vector.broadcast %cst : f32 to vector<1x256xf32>
    %7 = arith.maximumf %6, %4 : vector<1x256xf32>
    %8 = vector.broadcast %cst_7 : f32 to vector<1x256xf32>
    %9 = arith.minimumf %8, %7 : vector<1x256xf32>
    %cst_8 = arith.constant 1.000000e+00 : f32
    %10 = vector.broadcast %cst_8 : f32 to vector<1x256xf32>
    %11 = arith.addf %4, %10 : vector<1x256xf32>
    %cst_9 = arith.constant 0.000000e+00 : f32
    %cst_10 = arith.constant 1.700000e+01 : f32
    %12 = vector.broadcast %cst_9 : f32 to vector<1x256xf32>
    %13 = arith.maximumf %12, %11 : vector<1x256xf32>
    %14 = vector.broadcast %cst_10 : f32 to vector<1x256xf32>
    %15 = arith.minimumf %14, %13 : vector<1x256xf32>
    %cst_11 = arith.constant 0.000000e+00 : f32
    %cst_12 = arith.constant 1.700000e+01 : f32
    %16 = vector.broadcast %cst_11 : f32 to vector<1x256xf32>
    %17 = arith.maximumf %16, %5 : vector<1x256xf32>
    %18 = vector.broadcast %cst_12 : f32 to vector<1x256xf32>
    %19 = arith.minimumf %18, %17 : vector<1x256xf32>
    %cst_13 = arith.constant 1.000000e+00 : f32
    %20 = vector.broadcast %cst_13 : f32 to vector<1x256xf32>
    %21 = arith.addf %5, %20 : vector<1x256xf32>
    %cst_14 = arith.constant 0.000000e+00 : f32
    %cst_15 = arith.constant 1.700000e+01 : f32
    %22 = vector.broadcast %cst_14 : f32 to vector<1x256xf32>
    %23 = arith.maximumf %22, %21 : vector<1x256xf32>
    %24 = vector.broadcast %cst_15 : f32 to vector<1x256xf32>
    %25 = arith.minimumf %24, %23 : vector<1x256xf32>
    %26 = arith.subf %15, %1 : vector<1x256xf32>
    %27 = arith.subf %25, %3 : vector<1x256xf32>
    %28 = arith.fptosi %9 : vector<1x256xf32> to vector<1x256xi32>
    %29 = arith.fptosi %15 : vector<1x256xf32> to vector<1x256xi32>
    %30 = arith.fptosi %19 : vector<1x256xf32> to vector<1x256xi32>
    %31 = arith.fptosi %25 : vector<1x256xf32> to vector<1x256xi32>
    %c1_i32 = arith.constant 1 : i32
    %32 = vector.broadcast %c1_i32 : i32 to vector<1x256xi32>
    %33 = arith.cmpi sge, %28, %32 : vector<1x256xi32>
    %c16_i32 = arith.constant 16 : i32
    %34 = vector.broadcast %c16_i32 : i32 to vector<1x256xi32>
    %35 = arith.cmpi sle, %28, %34 : vector<1x256xi32>
    %36 = arith.andi %33, %35 : vector<1x256xi1>
    %c1_i32_16 = arith.constant 1 : i32
    %37 = vector.broadcast %c1_i32_16 : i32 to vector<1x256xi32>
    %38 = arith.cmpi sge, %29, %37 : vector<1x256xi32>
    %c16_i32_17 = arith.constant 16 : i32
    %39 = vector.broadcast %c16_i32_17 : i32 to vector<1x256xi32>
    %40 = arith.cmpi sle, %29, %39 : vector<1x256xi32>
    %41 = arith.andi %38, %40 : vector<1x256xi1>
    %c1_i32_18 = arith.constant 1 : i32
    %42 = vector.broadcast %c1_i32_18 : i32 to vector<1x256xi32>
    %43 = arith.cmpi sge, %30, %42 : vector<1x256xi32>
    %c16_i32_19 = arith.constant 16 : i32
    %44 = vector.broadcast %c16_i32_19 : i32 to vector<1x256xi32>
    %45 = arith.cmpi sle, %30, %44 : vector<1x256xi32>
    %46 = arith.andi %43, %45 : vector<1x256xi1>
    %c1_i32_20 = arith.constant 1 : i32
    %47 = vector.broadcast %c1_i32_20 : i32 to vector<1x256xi32>
    %48 = arith.cmpi sge, %31, %47 : vector<1x256xi32>
    %c16_i32_21 = arith.constant 16 : i32
    %49 = vector.broadcast %c16_i32_21 : i32 to vector<1x256xi32>
    %50 = arith.cmpi sle, %31, %49 : vector<1x256xi32>
    %51 = arith.andi %48, %50 : vector<1x256xi1>
    %52 = arith.andi %46, %36 : vector<1x256xi1>
    %53 = arith.mulf %26, %27 : vector<1x256xf32>
    %cst_22 = arith.constant 0.000000e+00 : f32
    %54 = vector.broadcast %cst_22 : f32 to vector<1x256xf32>
    %55 = arith.select %52, %53, %54 : vector<1x256xi1>, vector<1x256xf32>
    %56 = arith.andi %46, %41 : vector<1x256xi1>
    %cst_23 = arith.constant 1.000000e+00 : f32
    %57 = vector.broadcast %cst_23 : f32 to vector<1x256xf32>
    %58 = arith.subf %57, %27 : vector<1x256xf32>
    %59 = arith.mulf %26, %58 : vector<1x256xf32>
    %cst_24 = arith.constant 0.000000e+00 : f32
    %60 = vector.broadcast %cst_24 : f32 to vector<1x256xf32>
    %61 = arith.select %56, %59, %60 : vector<1x256xi1>, vector<1x256xf32>
    %62 = arith.andi %51, %36 : vector<1x256xi1>
    %cst_25 = arith.constant 1.000000e+00 : f32
    %63 = vector.broadcast %cst_25 : f32 to vector<1x256xf32>
    %64 = arith.subf %63, %26 : vector<1x256xf32>
    %65 = arith.mulf %64, %27 : vector<1x256xf32>
    %cst_26 = arith.constant 0.000000e+00 : f32
    %66 = vector.broadcast %cst_26 : f32 to vector<1x256xf32>
    %67 = arith.select %62, %65, %66 : vector<1x256xi1>, vector<1x256xf32>
    %68 = arith.andi %51, %41 : vector<1x256xi1>
    %cst_27 = arith.constant 1.000000e+00 : f32
    %69 = vector.broadcast %cst_27 : f32 to vector<1x256xf32>
    %70 = arith.subf %69, %26 : vector<1x256xf32>
    %cst_28 = arith.constant 1.000000e+00 : f32
    %71 = vector.broadcast %cst_28 : f32 to vector<1x256xf32>
    %72 = arith.subf %71, %27 : vector<1x256xf32>
    %73 = arith.mulf %70, %72 : vector<1x256xf32>
    %cst_29 = arith.constant 0.000000e+00 : f32
    %74 = vector.broadcast %cst_29 : f32 to vector<1x256xf32>
    %75 = arith.select %68, %73, %74 : vector<1x256xi1>, vector<1x256xf32>
    %c1_i32_30 = arith.constant 1 : i32
    %76 = vector.broadcast %c1_i32_30 : i32 to vector<1x256xi32>
    %77 = arith.subi %30, %76 : vector<1x256xi32>
    %c16_i32_31 = arith.constant 16 : i32
    %78 = vector.broadcast %c16_i32_31 : i32 to vector<1x256xi32>
    %79 = arith.muli %77, %78 : vector<1x256xi32>
    %c1_i32_32 = arith.constant 1 : i32
    %80 = vector.broadcast %c1_i32_32 : i32 to vector<1x256xi32>
    %81 = arith.subi %28, %80 : vector<1x256xi32>
    %82 = arith.addi %79, %81 : vector<1x256xi32>
    %cst_33 = arith.constant 0.000000e+00 : f32
    %83 = vector.broadcast %cst_33 : f32 to vector<1x4x256xf32>
    %c0_34 = arith.constant 0 : index
    %c0_35 = arith.constant 0 : index
    %c0_36 = arith.constant 0 : index
    %84 = vector.load %arg7[%c0_34, %c0_35, %c0_36] : memref<1x4x256xf32, #tpu.memory_space<vmem>>, vector<1x4x256xf32>
    tpu.vector_store %arg7[%c0_34, %c0_35, %c0_36], %83 {strides = array<i32>} : memref<1x4x256xf32, #tpu.memory_space<vmem>>, vector<1x4x256xf32>,
    %85 = tpu.iota {dimensions = array<i32: 0>} : vector<128x256xi32>
    %86 = arith.index_cast %arg0 : i32 to index
    %87 = arith.index_cast %arg1 : i32 to index
    %88 = memref.load %arg2[%86, %87] : memref<2x1xi32, #tpu.memory_space<smem>>
    %89 = arith.index_cast %arg0 : i32 to index
    %90 = arith.index_cast %arg1 : i32 to index
    %91 = memref.load %arg3[%89, %90] : memref<2x1xi32, #tpu.memory_space<smem>>
    %c0_i32 = arith.constant 0 : i32
    %92 = arith.subi %91, %88 : i32
    %93 = arith.addi %88, %92 : i32
    %c1_i32_37 = arith.constant 1 : i32
    scf.for %arg8 = %88 to %93 step %c1_i32_37  : i32 {
      %c128_i32 = arith.constant 128 : i32
      %94 = arith.muli %arg8, %c128_i32 : i32
      %95 = vector.broadcast %94 : i32 to vector<1x256xi32>
      %96 = arith.subi %95, %82 : vector<1x256xi32>
      %97 = vector.broadcast %96 : vector<1x256xi32> to vector<128x256xi32>
      %98 = arith.addi %85, %97 : vector<128x256xi32>
      %c0_i32_38 = arith.constant 0 : i32
      %99 = vector.broadcast %c0_i32_38 : i32 to vector<128x256xi32>
      %100 = arith.cmpi eq, %98, %99 : vector<128x256xi32>
      %cst_39 = arith.constant 0.000000e+00 : f32
      %101 = vector.shape_cast %55 : vector<1x256xf32> to vector<1x256xf32>
      %102 = vector.broadcast %101 : vector<1x256xf32> to vector<128x256xf32>
      %103 = vector.broadcast %cst_39 : f32 to vector<128x256xf32>
      %104 = arith.select %100, %102, %103 : vector<128x256xi1>, vector<128x256xf32>
      %c1_i32_40 = arith.constant 1 : i32
      %105 = vector.broadcast %c1_i32_40 : i32 to vector<128x256xi32>
      %106 = arith.cmpi eq, %98, %105 : vector<128x256xi32>
      %cst_41 = arith.constant 0.000000e+00 : f32
      %107 = vector.shape_cast %61 : vector<1x256xf32> to vector<1x256xf32>
      %108 = vector.broadcast %107 : vector<1x256xf32> to vector<128x256xf32>
      %109 = vector.broadcast %cst_41 : f32 to vector<128x256xf32>
      %110 = arith.select %106, %108, %109 : vector<128x256xi1>, vector<128x256xf32>
      %111 = arith.addf %104, %110 : vector<128x256xf32>
      %c16_i32_42 = arith.constant 16 : i32
      %112 = vector.broadcast %c16_i32_42 : i32 to vector<128x256xi32>
      %113 = arith.cmpi eq, %98, %112 : vector<128x256xi32>
      %cst_43 = arith.constant 0.000000e+00 : f32
      %114 = vector.shape_cast %67 : vector<1x256xf32> to vector<1x256xf32>
      %115 = vector.broadcast %114 : vector<1x256xf32> to vector<128x256xf32>
      %116 = vector.broadcast %cst_43 : f32 to vector<128x256xf32>
      %117 = arith.select %113, %115, %116 : vector<128x256xi1>, vector<128x256xf32>
      %118 = arith.addf %111, %117 : vector<128x256xf32>
      %c17_i32 = arith.constant 17 : i32
      %119 = vector.broadcast %c17_i32 : i32 to vector<128x256xi32>
      %120 = arith.cmpi eq, %98, %119 : vector<128x256xi32>
      %cst_44 = arith.constant 0.000000e+00 : f32
      %121 = vector.shape_cast %75 : vector<1x256xf32> to vector<1x256xf32>
      %122 = vector.broadcast %121 : vector<1x256xf32> to vector<128x256xf32>
      %123 = vector.broadcast %cst_44 : f32 to vector<128x256xf32>
      %124 = arith.select %120, %122, %123 : vector<128x256xi1>, vector<128x256xf32>
      %125 = arith.addf %118, %124 : vector<128x256xf32>
      %c0_45 = arith.constant 0 : index
      %c0_46 = arith.constant 0 : index
      %c0_47 = arith.constant 0 : index
      %126 = vector.load %arg7[%c0_45, %c0_46, %c0_47] : memref<1x4x256xf32, #tpu.memory_space<vmem>>, vector<1x4x256xf32>
      %127 = vector.shape_cast %126 : vector<1x4x256xf32> to vector<4x256xf32>
      %c0_48 = arith.constant 0 : index
      %128 = arith.index_cast %arg8 : i32 to index
      %c0_49 = arith.constant 0 : index
      %c0_50 = arith.constant 0 : index
      %129 = vector.load %arg4[%c0_48, %128, %c0_49, %c0_50] : memref<1x2x4x128xbf16, #tpu.memory_space<vmem>>, vector<1x1x4x128xbf16>
      %130 = vector.shape_cast %129 : vector<1x1x4x128xbf16> to vector<4x128xbf16>
      %131 = arith.truncf %125 : vector<128x256xf32> to vector<128x256xbf16>
      %cst_51 = arith.constant dense<0.000000e+00> : vector<4x256xf32>
      %132 = tpu.matmul %130, %131, %cst_51 {dimension_numbers = #tpu.dot_dimension_numbers<[1], [0], [0], [1], [0, 0, 1, 1], [], []>} : vector<4x128xbf16>, vector<128x256xbf16>, vector<4x256xf32> -> vector<4x256xf32>
      %133 = arith.addf %127, %132 : vector<4x256xf32>
      %c0_52 = arith.constant 0 : index
      %c0_53 = arith.constant 0 : index
      %c0_54 = arith.constant 0 : index
      %134 = vector.load %arg7[%c0_52, %c0_53, %c0_54] : memref<1x4x256xf32, #tpu.memory_space<vmem>>, vector<1x4x256xf32>
      %135 = vector.shape_cast %134 : vector<1x4x256xf32> to vector<4x256xf32>
      %136 = vector.shape_cast %133 : vector<4x256xf32> to vector<1x4x256xf32>
      tpu.vector_store %arg7[%c0_52, %c0_53, %c0_54], %136 {strides = array<i32>} : memref<1x4x256xf32, #tpu.memory_space<vmem>>, vector<1x4x256xf32>,
    }
    return
  }
  func.func @transform_0(%arg0: i32, %arg1: i32, %arg2: memref<2x1xi32, #tpu.memory_space<smem>>, %arg3: memref<2x1xi32, #tpu.memory_space<smem>>) -> (i32, i32, i32, i32) {
    %c0_i32 = arith.constant 0 : i32
    %c0_i32_0 = arith.constant 0 : i32
    %c0_i32_1 = arith.constant 0 : i32
    %c0_i32_2 = arith.constant 0 : i32
    return %arg0, %c0_i32, %c0_i32_0, %c0_i32_1 : i32, i32, i32, i32
  }
  func.func @transform_1(%arg0: i32, %arg1: i32, %arg2: memref<2x1xi32, #tpu.memory_space<smem>>, %arg3: memref<2x1xi32, #tpu.memory_space<smem>>) -> (i32, i32, i32, i32) {
    %c0_i32 = arith.constant 0 : i32
    %c0_i32_0 = arith.constant 0 : i32
    %c0_i32_1 = arith.constant 0 : i32
    return %arg0, %arg1, %c0_i32, %c0_i32_0 : i32, i32, i32, i32
  }
  func.func @transform_2(%arg0: i32, %arg1: i32, %arg2: memref<2x1xi32, #tpu.memory_space<smem>>, %arg3: memref<2x1xi32, #tpu.memory_space<smem>>) -> (i32, i32, i32, i32) {
    %c0_i32 = arith.constant 0 : i32
    %c0_i32_0 = arith.constant 0 : i32
    %c0_i32_1 = arith.constant 0 : i32
    return %arg0, %arg1, %c0_i32, %c0_i32_0 : i32, i32, i32, i32
  }
  func.func @transform_3(%arg0: i32, %arg1: i32, %arg2: memref<2x1xi32, #tpu.memory_space<smem>>, %arg3: memref<2x1xi32, #tpu.memory_space<smem>>) -> (i32, i32, i32) {
    %c0_i32 = arith.constant 0 : i32
    %c0_i32_0 = arith.constant 0 : i32
    return %arg0, %c0_i32, %arg1 : i32, i32, i32
  }
}

</mosaic_0001>

<llo_original>
// kernel: tpu_custom_call.1
$region0: #{tpu_custom_call.1}
  #allocation0 [shape = 'u32[]', space=smem, size = 0x4, offset = 0x4, fixed_abs, tag = 'smem constant byte address 0x4 - core index']
  #allocation1 [shape = 'u32[72,128]{1,0:T(1,128)}', space=vmem, size = 0x9000, scoped, tag = 'internal scratch']
  #allocation2 [shape = 's32[1]{0}', space=sflag, size = 0x4, scoped, tag = 'scoped memory for tpu_custom_call.1']
  #allocation3 [shape = 'u8[1024]{0}', space=smem, size = 0x400, scoped, tag = 'prefetched SMEM operand 0']
  #allocation4 [shape = 'u8[1024]{0}', space=smem, size = 0x400, scoped, tag = 'prefetched SMEM operand 1']
  %s0 = inlined_call_operand.vmem [shape: s32[2,1], index: 0, kind: input, shape index: {}]
  %s1 = inlined_call_operand.vmem [shape: s32[2,1], index: 1, kind: input, shape index: {}]
  %s2 = inlined_call_operand.hbm [shape: bf16[2,2,4,128], index: 2, kind: input, shape index: {}]
  %s3 = inlined_call_operand.vmem [shape: f32[2,1,1,256], index: 3, kind: input, shape index: {}]
  %s4 = inlined_call_operand.hbm [shape: f32[2,1,1,256], index: 4, kind: input, shape index: {}]
  %s5 = inlined_call_operand.hbm [shape: f32[2,4,256], index: 5, kind: output, shape index: {}]
  %s6 = sld [smem:[#allocation0]]
  $region60: #{tpu_custom_call.1} parent=0
    _
  %s8 = ssub.s32 1, %s6
  %s9 = scalar_select 0, %s8, %s6
  %s11 = sshll.u32 %s0, 4
  %s12 = int_to_ptr.vmem [resolvable:$true] %s11
  %14 = dma.vmem_to_smem %s12, 32, [#allocation3], [#allocation2]
  %s16 = sshll.u32 %s1, 4
  %s17 = int_to_ptr.vmem [resolvable:$true] %s16
  %19 = dma.vmem_to_smem %s17, 32, [#allocation4], [#allocation2]
  %21 = dma.done [#allocation2], 64
  %22 = sfence
  $region1: #{tpu_custom_call.1} parent=0
    #allocation5 [shape = 'u8[4096]{0}', space=vmem, size = 0x1000, scoped, tag = 'input window, operand 2']
    #allocation6 [shape = 's32[2]{0}', space=sflag, size = 0x8, scoped, tag = 'scoped memory for tpu_custom_call.1']
    #allocation7 [shape = 's32[2]{0}', space=sflag, size = 0x8, scoped, tag = 'scoped memory for tpu_custom_call.1']
    #allocation8 [shape = 'u8[2048]{0}', space=vmem, size = 0x800, scoped, tag = 'input window, operand 4']
    #allocation9 [shape = 's32[2]{0}', space=sflag, size = 0x8, scoped, tag = 'scoped memory for tpu_custom_call.1']
    #allocation10 [shape = 'u8[8192]{0}', space=vmem, size = 0x2000, scoped, tag = 'output window, operand 0']
    %23 = vsyncpa [#allocation6], 0
    %s24 = scalar_lea.sflag [#allocation6], 1
    %25 = vsyncpa %s24, 0
    %26 = vsyncpa [#allocation9], 0
    %s27 = scalar_lea.sflag [#allocation9], 1
    %28 = vsyncpa %s27, 0
    %29 = vsyncpa [#allocation7], 0
    %s30 = scalar_lea.sflag [#allocation7], 1
    %31 = vsyncpa %s30, 0
    loop: start=0, step=1, limit=4
    $region2: #{tpu_custom_call.1} parent=1 // loop_pre_header
      _
    $region3: #{tpu_custom_call.1} parent=1 // loop_header
      %s33 = sphi 0, %s37
      %p34 = scmp.ge.s32.totalorder %s33, 4
      %s40 = sphi 0, %s52
      %s41 = sphi 0, %s48
      %s42 = sphi 0, %s40
      %s43 = sphi 0, %s41
      %s44 = sphi 0, %s42
      %s45 = sphi 0, %s43
      %s55 = sphi 0, %s57
      %s58 = sphi 0, %s55
      %s59 = sphi 0, %s58
      %s75 = sphi 0, %s59
      %s83 = sphi 0, %s85
      %s86 = sphi 0, %s83
      %s87 = sphi 0, %s86
      %s103 = sphi 0, %s87
      %s111 = sphi 0, %s113
      %s114 = sphi 0, %s111
      %s115 = sphi 0, %s114
      %s131 = sphi 0, %s115
      %s139 = sphi 0, %s141
      %s142 = sphi 0, %s139
      %s143 = sphi 0, %s142
      %s159 = sphi 0, %s143
    $region4: #{tpu_custom_call.1} parent=1 // loop_header_branch
      %36 = sbr.rel (%p34) target = $region8
    $region5: #{tpu_custom_call.1} parent=1 // loop_body
      %s38 = ssub.s32 %s33, 1
      %s39 = ssub.s32 %s33, 2
      %s46 = sadd.s32 1, %s41
      %p47 = scmp.ge.s32.totalorder %s46, 1
      %s48 = scalar_select %p47, 0, %s46
      %s49 = sadd.s32 1, %s40
      %s50 = scalar_select %p47, %s49, %s40
      %p51 = scmp.ge.s32.totalorder %s50, 2
      %s52 = scalar_select %p51, 0, %s50
      %s53 = ssub.s32 %s40, %s52
      %p54 = scmp.eq.s32.totalorder %s53, 0
      %s56 = sadd.s32 %s55, 1
      %s57 = scalar_select %p54, %s55, %s56
      %p60 = pneg %p54
      %p61 = scmp.eq.s32.totalorder %s33, 1
      %p62 = por %p60, %p61
      %p63 = scmp.ne.s32.totalorder %s55, %s58
      %p64 = scmp.eq.s32.totalorder %s33, 0
      %p65 = por %p63, %p64
      %p66 = scmp.ne.s32.totalorder %s55, %s58
      %p67 = scmp.eq.s32.totalorder %s38, 1
      %p68 = por %p66, %p67
      %p69 = scmp.ne.s32.totalorder %s58, %s59
      %p70 = scmp.eq.s32.totalorder %s38, 0
      %p71 = por %p69, %p70
      %p72 = scmp.ne.s32.totalorder %s58, %s59
      %p73 = scmp.eq.s32.totalorder %s39, 1
      %p74 = por %p72, %p73
      %p76 = scmp.ne.s32.totalorder %s59, %s75
      %p77 = scmp.eq.s32.totalorder %s39, 0
      %p78 = por %p76, %p77
      %s79 = ssub.s32 %s40, %s52
      %s80 = ssub.s32 %s41, %s48
      %s81 = sor.u32 %s79, %s80
      %p82 = scmp.eq.s32.totalorder %s81, 0
      %s84 = sadd.s32 %s83, 1
      %s85 = scalar_select %p82, %s83, %s84
      %p88 = pneg %p82
      %p89 = scmp.eq.s32.totalorder %s33, 1
      %p90 = por %p88, %p89
      %p91 = scmp.ne.s32.totalorder %s83, %s86
      %p92 = scmp.eq.s32.totalorder %s33, 0
      %p93 = por %p91, %p92
      %p94 = scmp.ne.s32.totalorder %s83, %s86
      %p95 = scmp.eq.s32.totalorder %s38, 1
      %p96 = por %p94, %p95
      %p97 = scmp.ne.s32.totalorder %s86, %s87
      %p98 = scmp.eq.s32.totalorder %s38, 0
      %p99 = por %p97, %p98
      %p100 = scmp.ne.s32.totalorder %s86, %s87
      %p101 = scmp.eq.s32.totalorder %s39, 1
      %p102 = por %p100, %p101
      %p104 = scmp.ne.s32.totalorder %s87, %s103
      %p105 = scmp.eq.s32.totalorder %s39, 0
      %p106 = por %p104, %p105
      %s107 = ssub.s32 %s40, %s52
      %s108 = ssub.s32 %s41, %s48
      %s109 = sor.u32 %s107, %s108
      %p110 = scmp.eq.s32.totalorder %s109, 0
      %s112 = sadd.s32 %s111, 1
      %s113 = scalar_select %p110, %s111, %s112
      %p116 = pneg %p110
      %p117 = scmp.eq.s32.totalorder %s33, 1
      %p118 = por %p116, %p117
      %p119 = scmp.ne.s32.totalorder %s111, %s114
      %p120 = scmp.eq.s32.totalorder %s33, 0
      %p121 = por %p119, %p120
      %p122 = scmp.ne.s32.totalorder %s111, %s114
      %p123 = scmp.eq.s32.totalorder %s38, 1
      %p124 = por %p122, %p123
      %p125 = scmp.ne.s32.totalorder %s114, %s115
      %p126 = scmp.eq.s32.totalorder %s38, 0
      %p127 = por %p125, %p126
      %p128 = scmp.ne.s32.totalorder %s114, %s115
      %p129 = scmp.eq.s32.totalorder %s39, 1
      %p130 = por %p128, %p129
      %p132 = scmp.ne.s32.totalorder %s115, %s131
      %p133 = scmp.eq.s32.totalorder %s39, 0
      %p134 = por %p132, %p133
      %s135 = ssub.s32 %s40, %s52
      %s136 = ssub.s32 %s41, %s48
      %s137 = sor.u32 %s135, %s136
      %p138 = scmp.eq.s32.totalorder %s137, 0
      %s140 = sadd.s32 %s139, 1
      %s141 = scalar_select %p138, %s139, %s140
      %p144 = pneg %p138
      %p145 = scmp.eq.s32.totalorder %s33, 1
      %p146 = por %p144, %p145
      %p147 = scmp.ne.s32.totalorder %s139, %s142
      %p148 = scmp.eq.s32.totalorder %s33, 0
      %p149 = por %p147, %p148
      %p150 = scmp.ne.s32.totalorder %s139, %s142
      %p151 = scmp.eq.s32.totalorder %s38, 1
      %p152 = por %p150, %p151
      %p153 = scmp.ne.s32.totalorder %s142, %s143
      %p154 = scmp.eq.s32.totalorder %s38, 0
      %p155 = por %p153, %p154
      %p156 = scmp.ne.s32.totalorder %s142, %s143
      %p157 = scmp.eq.s32.totalorder %s39, 1
      %p158 = por %p156, %p157
      %p160 = scmp.ne.s32.totalorder %s143, %s159
      %p161 = scmp.eq.s32.totalorder %s39, 0
      %p162 = por %p160, %p161
      %p163 = scmp.le.s32.totalorder 1, %s33
      %p164 = scmp.lt.s32.totalorder %s33, 3
      %p165 = pnand %p163, %p164
      %p166 = pneg %p165
      // Predicated region
      $region9: #{tpu_custom_call.1} parent=5 // pred_check
        _
      $region10: #{tpu_custom_call.1} parent=5 // pred_check_branch
        %168 = sbr.rel (%p165) target = $region12
      $region11: #{tpu_custom_call.1} parent=5 // pred_region
        %s169 = ssub.s32 %s33, 1
      $region12: #{tpu_custom_call.1} parent=5 // pred_fallthru
        _
      %p170 = scmp.lt.s32.totalorder %s33, 2
      // Predicated region
      $region13: #{tpu_custom_call.1} parent=5 // pred_check
        %p171 = pneg %p170
      $region14: #{tpu_custom_call.1} parent=5 // pred_check_branch
        %173 = sbr.rel (%p171) target = $region16
      $region15: #{tpu_custom_call.1} parent=5 // pred_region
        // Predicated region
        $region17: #{tpu_custom_call.1} parent=15 // pred_check
          %p174 = pneg %p65
        $region18: #{tpu_custom_call.1} parent=15 // pred_check_branch
          %176 = sbr.rel (%p174) target = $region20
        $region19: #{tpu_custom_call.1} parent=15 // pred_region
          %s177 = sand.u32 %s55, 1
          %s178 = scalar_lea.sflag [#allocation6], %s177
          %s179 = sand.u32 %s55, 1
          %s180 = smul.addr %s179, 4
          %s181 = scalar_lea.vmem [#allocation5], %s180
          %183 = vsyncadd %s178, 0
          %s184 = smul.addr %s40, 2
          %s185 = smul.addr %s184, 2
          %s186 = scalar_lea.hbm %s2, %s185
          %s187 = sshll.u32 %s186, 4
          %s188 = int_to_ptr.hbm [resolvable:$true] %s187
          %s189 = sshll.u32 %s181, 4
          %s190 = int_to_ptr.vmem [resolvable:$true] %s189
          %195 = dma.hbm_to_vmem [thread:$0]  %s188, 64, %s190, %s178, 32, 32, 2
        $region20: #{tpu_custom_call.1} parent=15 // pred_fallthru
          _
        // Predicated region
        $region21: #{tpu_custom_call.1} parent=15 // pred_check
          %p196 = pneg %p93
        $region22: #{tpu_custom_call.1} parent=15 // pred_check_branch
          %198 = sbr.rel (%p196) target = $region24
        $region23: #{tpu_custom_call.1} parent=15 // pred_region
          %p199 = scmp.lt.s32.totalorder %s40, 1
          %s200 = scalar_select %p199, %s40, 1
          %p201 = scmp.lt.s32.totalorder %s41, 0
          %s202 = scalar_select %p201, %s41, 0
          %s203 = smul.addr %s202, 2
          %s204 = smul.addr %s200, 2
          %s205 = sadd.s32 %s203, %s204
          %s206 = scalar_lea.vmem %s3, %s205
        $region24: #{tpu_custom_call.1} parent=15 // pred_fallthru
          _
        // Predicated region
        $region25: #{tpu_custom_call.1} parent=15 // pred_check
          %p207 = pneg %p121
        $region26: #{tpu_custom_call.1} parent=15 // pred_check_branch
          %209 = sbr.rel (%p207) target = $region28
        $region27: #{tpu_custom_call.1} parent=15 // pred_region
          %s210 = sand.u32 %s111, 1
          %s211 = scalar_lea.sflag [#allocation9], %s210
          %s212 = sand.u32 %s111, 1
          %s213 = smul.addr %s212, 2
          %s214 = scalar_lea.vmem [#allocation8], %s213
          %216 = vsyncadd %s211, 0
          %s217 = smul.addr %s41, 2
          %s218 = smul.addr %s40, 2
          %s219 = sadd.s32 %s217, %s218
          %s220 = scalar_lea.hbm %s4, %s219
          %s222 = sshll.u32 %s220, 4
          %s223 = int_to_ptr.hbm [resolvable:$true] %s222
          %s224 = sshll.u32 %s214, 4
          %s225 = int_to_ptr.vmem [resolvable:$true] %s224
          %227 = dma.hbm_to_vmem [thread:$0]  %s223, 32, %s225, %s211
        $region28: #{tpu_custom_call.1} parent=15 // pred_fallthru
          _
      $region16: #{tpu_custom_call.1} parent=5 // pred_fallthru
        _
      %p228 = scmp.le.s32.totalorder 1, %s33
      %p229 = scmp.lt.s32.totalorder %s33, 3
      %p230 = pnand %p228, %p229
      %p231 = pneg %p230
      // Predicated region
      $region29: #{tpu_custom_call.1} parent=5 // pred_check
        _
      $region30: #{tpu_custom_call.1} parent=5 // pred_check_branch
        %233 = sbr.rel (%p230) target = $region32
      $region31: #{tpu_custom_call.1} parent=5 // pred_region
        %s234 = ssub.s32 %s33, 1
        %s235 = sand.u32 %s58, 1
        %s236 = scalar_lea.sflag [#allocation6], %s235
        %s237 = sand.u32 %s58, 1
        %s238 = smul.addr %s237, 4
        %s239 = scalar_lea.vmem [#allocation5], %s238
        // Predicated region
        $region33: #{tpu_custom_call.1} parent=31 // pred_check
          %p240 = pneg %p71
        $region34: #{tpu_custom_call.1} parent=31 // pred_check_branch
          %242 = sbr.rel (%p240) target = $region36
        $region35: #{tpu_custom_call.1} parent=31 // pred_region
          %244 = dma.done %s236, 64
        $region36: #{tpu_custom_call.1} parent=31 // pred_fallthru
          _
        %s245 = sand.u32 %s114, 1
        %s246 = scalar_lea.sflag [#allocation9], %s245
        %s247 = sand.u32 %s114, 1
        %s248 = smul.addr %s247, 2
        %s249 = scalar_lea.vmem [#allocation8], %s248
        // Predicated region
        $region37: #{tpu_custom_call.1} parent=31 // pred_check
          %p250 = pneg %p127
        $region38: #{tpu_custom_call.1} parent=31 // pred_check_branch
          %252 = sbr.rel (%p250) target = $region40
        $region39: #{tpu_custom_call.1} parent=31 // pred_region
          %254 = dma.done %s246, 32
        $region40: #{tpu_custom_call.1} parent=31 // pred_fallthru
          _
        %s255 = sand.u32 %s58, 1
        %s256 = scalar_lea.sflag [#allocation6], %s255
        %s257 = sand.u32 %s58, 1
        %s258 = smul.addr %s257, 4
        %s259 = scalar_lea.vmem [#allocation5], %s258
        %p260 = pneg %p71
        %p261 = pneg %p68
        %p262 = scmp.lt.s32.totalorder %s42, 1
        %s263 = scalar_select %p262, %s42, 1
        %p264 = scmp.lt.s32.totalorder %s43, 0
        %s265 = scalar_select %p264, %s43, 0
        %s266 = smul.addr %s265, 2
        %s267 = smul.addr %s263, 2
        %s268 = sadd.s32 %s266, %s267
        %s269 = scalar_lea.vmem %s3, %s268
        %p270 = pneg %p99
        %p271 = pneg %p96
        %s272 = sand.u32 %s114, 1
        %s273 = scalar_lea.sflag [#allocation9], %s272
        %s274 = sand.u32 %s114, 1
        %s275 = smul.addr %s274, 2
        %s276 = scalar_lea.vmem [#allocation8], %s275
        %p277 = pneg %p127
        %p278 = pneg %p124
        %p279 = pneg %p155
        %p280 = pneg %p152
        %s281 = sand.u32 %s142, 1
        %s282 = scalar_lea.sflag [#allocation7], %s281
        %s283 = sand.u32 %s142, 1
        %s284 = smul.addr %s283, 8
        %s285 = scalar_lea.vmem [#allocation10], %s284
        %p286 = scmp.lt.s32.totalorder %s42, 1
        %s287 = scalar_select %p286, %s42, 1
        %p288 = scmp.lt.s32.totalorder %s43, 0
        %s289 = scalar_select %p288, %s43, 0
        %s290 = smul.addr %s289, 2
        %s291 = smul.addr %s287, 2
        %s292 = sadd.s32 %s290, %s291
        %s293 = scalar_lea.vmem %s3, %s292
        %s294 = smul.u32 2, %s43
        %v295 = vld [vmem:[%s293] sm:$0x3]
        %v296 = vld [vmem:[%s249] sm:$0x3]
        %v297 = vfloor.f32 %v295
        %v298 = vfloor.f32 %v296
        %v299 = vmax.f32 %v297, 0.0
        %v300 = vmin.f32 %v299, 17.0
        %v301 = vadd.f32 %v297, 1.0
        %v302 = vmax.f32 %v301, 0.0
        %v303 = vmin.f32 %v302, 17.0
        %v304 = vmax.f32 %v298, 0.0
        %v305 = vmin.f32 %v304, 17.0
        %v306 = vadd.f32 %v298, 1.0
        %v307 = vmax.f32 %v306, 0.0
        %v308 = vmin.f32 %v307, 17.0
        %v309 = vsub.f32 %v303, %v295
        %v310 = vsub.f32 %v308, %v296
        %v311 = vcvt.f32.s32.to.zero.pseudo %v300
        %v312 = vcvt.f32.s32.to.zero.pseudo %v303
        %v313 = vcvt.f32.s32.to.zero.pseudo %v305
        %v314 = vcvt.f32.s32.to.zero.pseudo %v308
        %vm315 = vcmp.ge.s32.totalorder %v311, 1
        %vm316 = vcmp.le.s32.totalorder %v311, 16
        %vm317 = vmand %vm315, %vm316
        %vm318 = vcmp.ge.s32.totalorder %v312, 1
        %vm319 = vcmp.le.s32.totalorder %v312, 16
        %vm320 = vmand %vm318, %vm319
        %vm321 = vcmp.ge.s32.totalorder %v313, 1
        %vm322 = vcmp.le.s32.totalorder %v313, 16
        %vm323 = vmand %vm321, %vm322
        %vm324 = vcmp.ge.s32.totalorder %v314, 1
        %vm325 = vcmp.le.s32.totalorder %v314, 16
        %vm326 = vmand %vm324, %vm325
        %vm327 = vmand %vm323, %vm317
        %v328 = vmul.f32 %v309, %v310
        %v329 = vsel %vm327, %v328, 0.0
        %vm330 = vmand %vm323, %vm320
        %v331 = vsub.f32 1.0, %v310
        %v332 = vmul.f32 %v309, %v331
        %v333 = vsel %vm330, %v332, 0.0
        %vm334 = vmand %vm326, %vm317
        %v335 = vsub.f32 1.0, %v309
        %v336 = vmul.f32 %v335, %v310
        %v337 = vsel %vm334, %v336, 0.0
        %vm338 = vmand %vm326, %vm320
        %v339 = vmul.f32 %v335, %v331
        %v340 = vsel %vm338, %v339, 0.0
        %v341 = vsub.s32 %v313, 1
        %v342 = vmul.u32 %v341, 16
        %v343 = vsub.s32 %v311, 1
        %v344 = vadd.s32 %v342, %v343
        %345 = vst [vmem:[%s285] sm:$0xff] 0.0
        %v346 = vlaneseq
        %v347 = vshrl.u32 %v346, 7
        %v348 = vadd.s32 %v347, 8
        %v349 = vadd.s32 %v347, 16
        %v350 = vadd.s32 %v347, 24
        %v351 = vadd.s32 %v347, 32
        %v352 = vadd.s32 %v347, 40
        %v353 = vadd.s32 %v347, 48
        %v354 = vadd.s32 %v347, 56
        %v355 = vadd.s32 %v347, 64
        %v356 = vadd.s32 %v347, 72
        %v357 = vadd.s32 %v347, 80
        %v358 = vadd.s32 %v347, 88
        %v359 = vadd.s32 %v347, 96
        %v360 = vadd.s32 %v347, 104
        %v361 = vadd.s32 %v347, 112
        %v362 = vadd.s32 %v347, 120
        %s363 = sshra.s32 %s43, 7
        %s364 = sand.u32 %s43, 127
        %s365 = sadd.s32 %s363, %s42
        %s366 = smul.u32 %s365, 128
        %s367 = sshra.s32 %s43, 7
        %s368 = sand.u32 %s43, 127
        %s369 = sadd.s32 %s366, %s368
        %s370 = sld [smem:[#allocation3 + %s369]]
        %s371 = sld [smem:[#allocation4 + %s369]]
        // While loop
        $region41: #{tpu_custom_call.1} parent=31 // loop_pre_header
          _
        $region42: #{tpu_custom_call.1} parent=31 // loop_header
          %s373 = sphi %s370, %s375
          %p374 = scmp.ge.s32.totalorder %s373, %s371
        $region43: #{tpu_custom_call.1} parent=31 // loop_header_branch
          %377 = sbr.rel (%p374) target = $region47
        $region44: #{tpu_custom_call.1} parent=31 // loop_body
          %s378 = smul.u32 %s373, 128
          %v379 = vstv %s378
          %v380 = vsub.s32 %v379, %v344
          %v381 = vperm.slane %v380, 0
          %v382 = vperm.slane %v380, 1
          %v383 = vadd.s32 %v347, %v381
          %v384 = vadd.s32 %v347, %v382
          %v385 = vadd.s32 %v348, %v381
          %v386 = vadd.s32 %v348, %v382
          %v387 = vadd.s32 %v349, %v381
          %v388 = vadd.s32 %v349, %v382
          %v389 = vadd.s32 %v350, %v381
          %v390 = vadd.s32 %v350, %v382
          %v391 = vadd.s32 %v351, %v381
          %v392 = vadd.s32 %v351, %v382
          %v393 = vadd.s32 %v352, %v381
          %v394 = vadd.s32 %v352, %v382
          %v395 = vadd.s32 %v353, %v381
          %v396 = vadd.s32 %v353, %v382
          %v397 = vadd.s32 %v354, %v381
          %v398 = vadd.s32 %v354, %v382
          %v399 = vadd.s32 %v355, %v381
          %v400 = vadd.s32 %v355, %v382
          %v401 = vadd.s32 %v356, %v381
          %v402 = vadd.s32 %v356, %v382
          %v403 = vadd.s32 %v357, %v381
          %v404 = vadd.s32 %v357, %v382
          %v405 = vadd.s32 %v358, %v381
          %v406 = vadd.s32 %v358, %v382
          %v407 = vadd.s32 %v359, %v381
          %v408 = vadd.s32 %v359, %v382
          %v409 = vadd.s32 %v360, %v381
          %v410 = vadd.s32 %v360, %v382
          %v411 = vadd.s32 %v361, %v381
          %v412 = vadd.s32 %v361, %v382
          %v413 = vadd.s32 %v362, %v381
          %v414 = vadd.s32 %v362, %v382
          %vm415 = vcmp.eq.s32.totalorder %v383, 0
          %vm416 = vcmp.eq.s32.totalorder %v384, 0
          %vm417 = vcmp.eq.s32.totalorder %v385, 0
          %vm418 = vcmp.eq.s32.totalorder %v386, 0
          %vm419 = vcmp.eq.s32.totalorder %v387, 0
          %vm420 = vcmp.eq.s32.totalorder %v388, 0
          %vm421 = vcmp.eq.s32.totalorder %v389, 0
          %vm422 = vcmp.eq.s32.totalorder %v390, 0
          %vm423 = vcmp.eq.s32.totalorder %v391, 0
          %vm424 = vcmp.eq.s32.totalorder %v392, 0
          %vm425 = vcmp.eq.s32.totalorder %v393, 0
          %vm426 = vcmp.eq.s32.totalorder %v394, 0
          %vm427 = vcmp.eq.s32.totalorder %v395, 0
          %vm428 = vcmp.eq.s32.totalorder %v396, 0
          %vm429 = vcmp.eq.s32.totalorder %v397, 0
          %vm430 = vcmp.eq.s32.totalorder %v398, 0
          %vm431 = vcmp.eq.s32.totalorder %v399, 0
          %vm432 = vcmp.eq.s32.totalorder %v400, 0
          %vm433 = vcmp.eq.s32.totalorder %v401, 0
          %vm434 = vcmp.eq.s32.totalorder %v402, 0
          %vm435 = vcmp.eq.s32.totalorder %v403, 0
          %vm436 = vcmp.eq.s32.totalorder %v404, 0
          %vm437 = vcmp.eq.s32.totalorder %v405, 0
          %vm438 = vcmp.eq.s32.totalorder %v406, 0
          %vm439 = vcmp.eq.s32.totalorder %v407, 0
          %vm440 = vcmp.eq.s32.totalorder %v408, 0
          %vm441 = vcmp.eq.s32.totalorder %v409, 0
          %vm442 = vcmp.eq.s32.totalorder %v410, 0
          %vm443 = vcmp.eq.s32.totalorder %v411, 0
          %vm444 = vcmp.eq.s32.totalorder %v412, 0
          %vm445 = vcmp.eq.s32.totalorder %v413, 0
          %vm446 = vcmp.eq.s32.totalorder %v414, 0
          %v448 = vperm.slane %v329, 0
          %v449 = vperm.slane %v329, 1
          %v452 = vsel %vm415, %v448, 0.0
          %v453 = vsel %vm416, %v449, 0.0
          %v454 = vsel %vm417, %v448, 0.0
          %v455 = vsel %vm418, %v449, 0.0
          %v456 = vsel %vm419, %v448, 0.0
          %v457 = vsel %vm420, %v449, 0.0
          %v458 = vsel %vm421, %v448, 0.0
          %v459 = vsel %vm422, %v449, 0.0
          %v460 = vsel %vm423, %v448, 0.0
          %v461 = vsel %vm424, %v449, 0.0
          %v462 = vsel %vm425, %v448, 0.0
          %v463 = vsel %vm426, %v449, 0.0
          %v464 = vsel %vm427, %v448, 0.0
          %v465 = vsel %vm428, %v449, 0.0
          %v466 = vsel %vm429, %v448, 0.0
          %v467 = vsel %vm430, %v449, 0.0
          %v468 = vsel %vm431, %v448, 0.0
          %v469 = vsel %vm432, %v449, 0.0
          %v470 = vsel %vm433, %v448, 0.0
          %v471 = vsel %vm434, %v449, 0.0
          %v472 = vsel %vm435, %v448, 0.0
          %v473 = vsel %vm436, %v449, 0.0
          %v474 = vsel %vm437, %v448, 0.0
          %v475 = vsel %vm438, %v449, 0.0
          %v476 = vsel %vm439, %v448, 0.0
          %v477 = vsel %vm440, %v449, 0.0
          %v478 = vsel %vm441, %v448, 0.0
          %v479 = vsel %vm442, %v449, 0.0
          %v480 = vsel %vm443, %v448, 0.0
          %v481 = vsel %vm444, %v449, 0.0
          %v482 = vsel %vm445, %v448, 0.0
          %v483 = vsel %vm446, %v449, 0.0
          %vm484 = vcmp.eq.s32.totalorder %v383, 1
          %vm485 = vcmp.eq.s32.totalorder %v384, 1
          %vm486 = vcmp.eq.s32.totalorder %v385, 1
          %vm487 = vcmp.eq.s32.totalorder %v386, 1
          %vm488 = vcmp.eq.s32.totalorder %v387, 1
          %vm489 = vcmp.eq.s32.totalorder %v388, 1
          %vm490 = vcmp.eq.s32.totalorder %v389, 1
          %vm491 = vcmp.eq.s32.totalorder %v390, 1
          %vm492 = vcmp.eq.s32.totalorder %v391, 1
          %vm493 = vcmp.eq.s32.totalorder %v392, 1
          %vm494 = vcmp.eq.s32.totalorder %v393, 1
          %vm495 = vcmp.eq.s32.totalorder %v394, 1
          %vm496 = vcmp.eq.s32.totalorder %v395, 1
          %vm497 = vcmp.eq.s32.totalorder %v396, 1
          %vm498 = vcmp.eq.s32.totalorder %v397, 1
          %vm499 = vcmp.eq.s32.totalorder %v398, 1
          %vm500 = vcmp.eq.s32.totalorder %v399, 1
          %vm501 = vcmp.eq.s32.totalorder %v400, 1
          %vm502 = vcmp.eq.s32.totalorder %v401, 1
          %vm503 = vcmp.eq.s32.totalorder %v402, 1
          %vm504 = vcmp.eq.s32.totalorder %v403, 1
          %vm505 = vcmp.eq.s32.totalorder %v404, 1
          %vm506 = vcmp.eq.s32.totalorder %v405, 1
          %vm507 = vcmp.eq.s32.totalorder %v406, 1
          %vm508 = vcmp.eq.s32.totalorder %v407, 1
          %vm509 = vcmp.eq.s32.totalorder %v408, 1
          %vm510 = vcmp.eq.s32.totalorder %v409, 1
          %vm511 = vcmp.eq.s32.totalorder %v410, 1
          %vm512 = vcmp.eq.s32.totalorder %v411, 1
          %vm513 = vcmp.eq.s32.totalorder %v412, 1
          %vm514 = vcmp.eq.s32.totalorder %v413, 1
          %vm515 = vcmp.eq.s32.totalorder %v414, 1
          %v517 = vperm.slane %v333, 0
          %v518 = vperm.slane %v333, 1
          %v521 = vsel %vm484, %v517, 0.0
          %v522 = vsel %vm485, %v518, 0.0
          %v523 = vsel %vm486, %v517, 0.0
          %v524 = vsel %vm487, %v518, 0.0
          %v525 = vsel %vm488, %v517, 0.0
          %v526 = vsel %vm489, %v518, 0.0
          %v527 = vsel %vm490, %v517, 0.0
          %v528 = vsel %vm491, %v518, 0.0
          %v529 = vsel %vm492, %v517, 0.0
          %v530 = vsel %vm493, %v518, 0.0
          %v531 = vsel %vm494, %v517, 0.0
          %v532 = vsel %vm495, %v518, 0.0
          %v533 = vsel %vm496, %v517, 0.0
          %v534 = vsel %vm497, %v518, 0.0
          %v535 = vsel %vm498, %v517, 0.0
          %v536 = vsel %vm499, %v518, 0.0
          %v537 = vsel %vm500, %v517, 0.0
          %v538 = vsel %vm501, %v518, 0.0
          %v539 = vsel %vm502, %v517, 0.0
          %v540 = vsel %vm503, %v518, 0.0
          %v541 = vsel %vm504, %v517, 0.0
          %v542 = vsel %vm505, %v518, 0.0
          %v543 = vsel %vm506, %v517, 0.0
          %v544 = vsel %vm507, %v518, 0.0
          %v545 = vsel %vm508, %v517, 0.0
          %v546 = vsel %vm509, %v518, 0.0
          %v547 = vsel %vm510, %v517, 0.0
          %v548 = vsel %vm511, %v518, 0.0
          %v549 = vsel %vm512, %v517, 0.0
          %v550 = vsel %vm513, %v518, 0.0
          %v551 = vsel %vm514, %v517, 0.0
          %v552 = vsel %vm515, %v518, 0.0
          %v553 = vadd.f32 %v452, %v521
          %v554 = vadd.f32 %v453, %v522
          %v555 = vadd.f32 %v454, %v523
          %v556 = vadd.f32 %v455, %v524
          %v557 = vadd.f32 %v456, %v525
          %v558 = vadd.f32 %v457, %v526
          %v559 = vadd.f32 %v458, %v527
          %v560 = vadd.f32 %v459, %v528
          %v561 = vadd.f32 %v460, %v529
          %v562 = vadd.f32 %v461, %v530
          %v563 = vadd.f32 %v462, %v531
          %v564 = vadd.f32 %v463, %v532
          %v565 = vadd.f32 %v464, %v533
          %v566 = vadd.f32 %v465, %v534
          %v567 = vadd.f32 %v466, %v535
          %v568 = vadd.f32 %v467, %v536
          %v569 = vadd.f32 %v468, %v537
          %v570 = vadd.f32 %v469, %v538
          %v571 = vadd.f32 %v470, %v539
          %v572 = vadd.f32 %v471, %v540
          %v573 = vadd.f32 %v472, %v541
          %v574 = vadd.f32 %v473, %v542
          %v575 = vadd.f32 %v474, %v543
          %v576 = vadd.f32 %v475, %v544
          %v577 = vadd.f32 %v476, %v545
          %v578 = vadd.f32 %v477, %v546
          %v579 = vadd.f32 %v478, %v547
          %v580 = vadd.f32 %v479, %v548
          %v581 = vadd.f32 %v480, %v549
          %v582 = vadd.f32 %v481, %v550
          %v583 = vadd.f32 %v482, %v551
          %v584 = vadd.f32 %v483, %v552
          %vm585 = vcmp.eq.s32.totalorder %v383, 16
          %vm586 = vcmp.eq.s32.totalorder %v384, 16
          %vm587 = vcmp.eq.s32.totalorder %v385, 16
          %vm588 = vcmp.eq.s32.totalorder %v386, 16
          %vm589 = vcmp.eq.s32.totalorder %v387, 16
          %vm590 = vcmp.eq.s32.totalorder %v388, 16
          %vm591 = vcmp.eq.s32.totalorder %v389, 16
          %vm592 = vcmp.eq.s32.totalorder %v390, 16
          %vm593 = vcmp.eq.s32.totalorder %v391, 16
          %vm594 = vcmp.eq.s32.totalorder %v392, 16
          %vm595 = vcmp.eq.s32.totalorder %v393, 16
          %vm596 = vcmp.eq.s32.totalorder %v394, 16
          %vm597 = vcmp.eq.s32.totalorder %v395, 16
          %vm598 = vcmp.eq.s32.totalorder %v396, 16
          %vm599 = vcmp.eq.s32.totalorder %v397, 16
          %vm600 = vcmp.eq.s32.totalorder %v398, 16
          %vm601 = vcmp.eq.s32.totalorder %v399, 16
          %vm602 = vcmp.eq.s32.totalorder %v400, 16
          %vm603 = vcmp.eq.s32.totalorder %v401, 16
          %vm604 = vcmp.eq.s32.totalorder %v402, 16
          %vm605 = vcmp.eq.s32.totalorder %v403, 16
          %vm606 = vcmp.eq.s32.totalorder %v404, 16
          %vm607 = vcmp.eq.s32.totalorder %v405, 16
          %vm608 = vcmp.eq.s32.totalorder %v406, 16
          %vm609 = vcmp.eq.s32.totalorder %v407, 16
          %vm610 = vcmp.eq.s32.totalorder %v408, 16
          %vm611 = vcmp.eq.s32.totalorder %v409, 16
          %vm612 = vcmp.eq.s32.totalorder %v410, 16
          %vm613 = vcmp.eq.s32.totalorder %v411, 16
          %vm614 = vcmp.eq.s32.totalorder %v412, 16
          %vm615 = vcmp.eq.s32.totalorder %v413, 16
          %vm616 = vcmp.eq.s32.totalorder %v414, 16
          %v618 = vperm.slane %v337, 0
          %v619 = vperm.slane %v337, 1
          %v622 = vsel %vm585, %v618, 0.0
          %v623 = vsel %vm586, %v619, 0.0
          %v624 = vsel %vm587, %v618, 0.0
          %v625 = vsel %vm588, %v619, 0.0
          %v626 = vsel %vm589, %v618, 0.0
          %v627 = vsel %vm590, %v619, 0.0
          %v628 = vsel %vm591, %v618, 0.0
          %v629 = vsel %vm592, %v619, 0.0
          %v630 = vsel %vm593, %v618, 0.0
          %v631 = vsel %vm594, %v619, 0.0
          %v632 = vsel %vm595, %v618, 0.0
          %v633 = vsel %vm596, %v619, 0.0
          %v634 = vsel %vm597, %v618, 0.0
          %v635 = vsel %vm598, %v619, 0.0
          %v636 = vsel %vm599, %v618, 0.0
          %v637 = vsel %vm600, %v619, 0.0
          %v638 = vsel %vm601, %v618, 0.0
          %v639 = vsel %vm602, %v619, 0.0
          %v640 = vsel %vm603, %v618, 0.0
          %v641 = vsel %vm604, %v619, 0.0
          %v642 = vsel %vm605, %v618, 0.0
          %v643 = vsel %vm606, %v619, 0.0
          %v644 = vsel %vm607, %v618, 0.0
          %v645 = vsel %vm608, %v619, 0.0
          %v646 = vsel %vm609, %v618, 0.0
          %v647 = vsel %vm610, %v619, 0.0
          %v648 = vsel %vm611, %v618, 0.0
          %v649 = vsel %vm612, %v619, 0.0
          %v650 = vsel %vm613, %v618, 0.0
          %v651 = vsel %vm614, %v619, 0.0
          %v652 = vsel %vm615, %v618, 0.0
          %v653 = vsel %vm616, %v619, 0.0
          %v654 = vadd.f32 %v553, %v622
          %v655 = vadd.f32 %v554, %v623
          %v656 = vadd.f32 %v555, %v624
          %v657 = vadd.f32 %v556, %v625
          %v658 = vadd.f32 %v557, %v626
          %v659 = vadd.f32 %v558, %v627
          %v660 = vadd.f32 %v559, %v628
          %v661 = vadd.f32 %v560, %v629
          %v662 = vadd.f32 %v561, %v630
          %v663 = vadd.f32 %v562, %v631
          %v664 = vadd.f32 %v563, %v632
          %v665 = vadd.f32 %v564, %v633
          %v666 = vadd.f32 %v565, %v634
          %v667 = vadd.f32 %v566, %v635
          %v668 = vadd.f32 %v567, %v636
          %v669 = vadd.f32 %v568, %v637
          %v670 = vadd.f32 %v569, %v638
          %v671 = vadd.f32 %v570, %v639
          %v672 = vadd.f32 %v571, %v640
          %v673 = vadd.f32 %v572, %v641
          %v674 = vadd.f32 %v573, %v642
          %v675 = vadd.f32 %v574, %v643
          %v676 = vadd.f32 %v575, %v644
          %v677 = vadd.f32 %v576, %v645
          %v678 = vadd.f32 %v577, %v646
          %v679 = vadd.f32 %v578, %v647
          %v680 = vadd.f32 %v579, %v648
          %v681 = vadd.f32 %v580, %v649
          %v682 = vadd.f32 %v581, %v650
          %v683 = vadd.f32 %v582, %v651
          %v684 = vadd.f32 %v583, %v652
          %v685 = vadd.f32 %v584, %v653
          %vm686 = vcmp.eq.s32.totalorder %v383, 17
          %vm687 = vcmp.eq.s32.totalorder %v384, 17
          %vm688 = vcmp.eq.s32.totalorder %v385, 17
          %vm689 = vcmp.eq.s32.totalorder %v386, 17
          %vm690 = vcmp.eq.s32.totalorder %v387, 17
          %vm691 = vcmp.eq.s32.totalorder %v388, 17
          %vm692 = vcmp.eq.s32.totalorder %v389, 17
          %vm693 = vcmp.eq.s32.totalorder %v390, 17
          %vm694 = vcmp.eq.s32.totalorder %v391, 17
          %vm695 = vcmp.eq.s32.totalorder %v392, 17
          %vm696 = vcmp.eq.s32.totalorder %v393, 17
          %vm697 = vcmp.eq.s32.totalorder %v394, 17
          %vm698 = vcmp.eq.s32.totalorder %v395, 17
          %vm699 = vcmp.eq.s32.totalorder %v396, 17
          %vm700 = vcmp.eq.s32.totalorder %v397, 17
          %vm701 = vcmp.eq.s32.totalorder %v398, 17
          %vm702 = vcmp.eq.s32.totalorder %v399, 17
          %vm703 = vcmp.eq.s32.totalorder %v400, 17
          %vm704 = vcmp.eq.s32.totalorder %v401, 17
          %vm705 = vcmp.eq.s32.totalorder %v402, 17
          %vm706 = vcmp.eq.s32.totalorder %v403, 17
          %vm707 = vcmp.eq.s32.totalorder %v404, 17
          %vm708 = vcmp.eq.s32.totalorder %v405, 17
          %vm709 = vcmp.eq.s32.totalorder %v406, 17
          %vm710 = vcmp.eq.s32.totalorder %v407, 17
          %vm711 = vcmp.eq.s32.totalorder %v408, 17
          %vm712 = vcmp.eq.s32.totalorder %v409, 17
          %vm713 = vcmp.eq.s32.totalorder %v410, 17
          %vm714 = vcmp.eq.s32.totalorder %v411, 17
          %vm715 = vcmp.eq.s32.totalorder %v412, 17
          %vm716 = vcmp.eq.s32.totalorder %v413, 17
          %vm717 = vcmp.eq.s32.totalorder %v414, 17
          %v719 = vperm.slane %v340, 0
          %v720 = vperm.slane %v340, 1
          %v723 = vsel %vm686, %v719, 0.0
          %v724 = vsel %vm687, %v720, 0.0
          %v725 = vsel %vm688, %v719, 0.0
          %v726 = vsel %vm689, %v720, 0.0
          %v727 = vsel %vm690, %v719, 0.0
          %v728 = vsel %vm691, %v720, 0.0
          %v729 = vsel %vm692, %v719, 0.0
          %v730 = vsel %vm693, %v720, 0.0
          %v731 = vsel %vm694, %v719, 0.0
          %v732 = vsel %vm695, %v720, 0.0
          %v733 = vsel %vm696, %v719, 0.0
          %v734 = vsel %vm697, %v720, 0.0
          %v735 = vsel %vm698, %v719, 0.0
          %v736 = vsel %vm699, %v720, 0.0
          %v737 = vsel %vm700, %v719, 0.0
          %v738 = vsel %vm701, %v720, 0.0
          %v739 = vsel %vm702, %v719, 0.0
          %v740 = vsel %vm703, %v720, 0.0
          %v741 = vsel %vm704, %v719, 0.0
          %v742 = vsel %vm705, %v720, 0.0
          %v743 = vsel %vm706, %v719, 0.0
          %v744 = vsel %vm707, %v720, 0.0
          %v745 = vsel %vm708, %v719, 0.0
          %v746 = vsel %vm709, %v720, 0.0
          %v747 = vsel %vm710, %v719, 0.0
          %v748 = vsel %vm711, %v720, 0.0
          %v749 = vsel %vm712, %v719, 0.0
          %v750 = vsel %vm713, %v720, 0.0
          %v751 = vsel %vm714, %v719, 0.0
          %v752 = vsel %vm715, %v720, 0.0
          %v753 = vsel %vm716, %v719, 0.0
          %v754 = vsel %vm717, %v720, 0.0
          %v755 = vadd.f32 %v654, %v723
          %v756 = vadd.f32 %v655, %v724
          %v757 = vadd.f32 %v656, %v725
          %v758 = vadd.f32 %v657, %v726
          %v759 = vadd.f32 %v658, %v727
          %v760 = vadd.f32 %v659, %v728
          %v761 = vadd.f32 %v660, %v729
          %v762 = vadd.f32 %v661, %v730
          %v763 = vadd.f32 %v662, %v731
          %v764 = vadd.f32 %v663, %v732
          %v765 = vadd.f32 %v664, %v733
          %v766 = vadd.f32 %v665, %v734
          %v767 = vadd.f32 %v666, %v735
          %v768 = vadd.f32 %v667, %v736
          %v769 = vadd.f32 %v668, %v737
          %v770 = vadd.f32 %v669, %v738
          %v771 = vadd.f32 %v670, %v739
          %v772 = vadd.f32 %v671, %v740
          %v773 = vadd.f32 %v672, %v741
          %v774 = vadd.f32 %v673, %v742
          %v775 = vadd.f32 %v674, %v743
          %v776 = vadd.f32 %v675, %v744
          %v777 = vadd.f32 %v676, %v745
          %v778 = vadd.f32 %v677, %v746
          %v779 = vadd.f32 %v678, %v747
          %v780 = vadd.f32 %v679, %v748
          %v781 = vadd.f32 %v680, %v749
          %v782 = vadd.f32 %v681, %v750
          %v783 = vadd.f32 %v682, %v751
          %v784 = vadd.f32 %v683, %v752
          %v785 = vadd.f32 %v684, %v753
          %v786 = vadd.f32 %v685, %v754
          %v787 = vld [vmem:[%s285] sm:$0xff]
          %s788 = smul.addr %s373, 2
          %s789 = scalar_lea.vmem %s239, %s788 [#allocation5]
          %v790 = vld [vmem:[%s789] sm:$0x3]
          %v791 = vpack.c.bf16 %v757, %v755
          %v792 = vpack.c.bf16 %v758, %v756
          %v793 = vpack.c.bf16 %v761, %v759
          %v794 = vpack.c.bf16 %v762, %v760
          %v795 = vpack.c.bf16 %v765, %v763
          %v796 = vpack.c.bf16 %v766, %v764
          %v797 = vpack.c.bf16 %v769, %v767
          %v798 = vpack.c.bf16 %v770, %v768
          %v799 = vpack.c.bf16 %v773, %v771
          %v800 = vpack.c.bf16 %v774, %v772
          %v801 = vpack.c.bf16 %v777, %v775
          %v802 = vpack.c.bf16 %v778, %v776
          %v803 = vpack.c.bf16 %v781, %v779
          %v804 = vpack.c.bf16 %v782, %v780
          %v805 = vpack.c.bf16 %v785, %v783
          %v806 = vpack.c.bf16 %v786, %v784
          %807 = vmatpush.bf16.msra.mxu0 %v805
          %808 = vmatpush.bf16.msra.mxu0 %v803
          %809 = vmatpush.bf16.msra.mxu0 %v801
          %810 = vmatpush.bf16.msra.mxu0 %v799
          %811 = vmatpush.bf16.msra.mxu0 %v797
          %812 = vmatpush.bf16.msra.mxu0 %v795
          %813 = vmatpush.bf16.msra.mxu0 %v793
          %814 = vmatpush.bf16.msra.mxu0 %v791
          %815 = vmatmul.bf16.gmra.mxu0 %v790
          %v816 = vpop.f32.mrf.mxu0
          %v817 = vadd.f32 0.0, %v816
          %v818 = vpop.f32.mrf.mxu0
          %819 = vdwg.mxu0
          %820 = vmatpush.bf16.msra.mxu0 %v806
          %821 = vmatpush.bf16.msra.mxu0 %v804
          %822 = vmatpush.bf16.msra.mxu0 %v802
          %823 = vmatpush.bf16.msra.mxu0 %v800
          %824 = vmatpush.bf16.msra.mxu0 %v798
          %825 = vmatpush.bf16.msra.mxu0 %v796
          %826 = vmatpush.bf16.msra.mxu0 %v794
          %827 = vmatpush.bf16.msra.mxu0 %v792
          %828 = vmatmul.bf16.gmra.mxu0 %v790
          %v829 = vpop.f32.mrf.mxu0
          %v830 = vadd.f32 0.0, %v829
          %v831 = vpop.f32.mrf.mxu0
          %832 = vdwg.mxu0
          %v835 = vrot.slane %v830, 4
          %vm836 = vcmask 1043456
          %v837 = vsel %vm836, %v817, %v835
          %v839 = vadd.f32 %v787, %v837
          %840 = vst [vmem:[%s285] sm:$0xff] %v839
        $region45: #{tpu_custom_call.1} parent=31 // loop_footer
          %s375 = sadd.s32 %s373, 1
        $region46: #{tpu_custom_call.1} parent=31 // loop_footer_branch
          %372 = sbr.rel target = $region42
        $region47: #{tpu_custom_call.1} parent=31 // loop_exit
          _
        %s841 = sand.u32 %s142, 1
        %s842 = scalar_lea.sflag [#allocation7], %s841
        %s843 = sand.u32 %s142, 1
        %s844 = smul.addr %s843, 8
        %s845 = scalar_lea.vmem [#allocation10], %s844
        // Predicated region
        $region48: #{tpu_custom_call.1} parent=31 // pred_check
          %p846 = pneg %p152
        $region49: #{tpu_custom_call.1} parent=31 // pred_check_branch
          %848 = sbr.rel (%p846) target = $region51
        $region50: #{tpu_custom_call.1} parent=31 // pred_region
          %s849 = smul.u32 2, %s43
          %851 = vsyncadd %s842, 0
          %s852 = smul.addr %s42, 2
          %s853 = sadd.s32 %s849, %s852
          %s854 = smul.addr %s853, 4
          %s855 = scalar_lea.hbm %s5, %s854
          %s857 = sshll.u32 %s845, 4
          %s858 = int_to_ptr.vmem [resolvable:$true] %s857
          %s859 = sshll.u32 %s855, 4
          %s860 = int_to_ptr.hbm [resolvable:$true] %s859
          %862 = dma.vmem_to_hbm [thread:$0]  %s858, 128, %s860, %s842
        $region51: #{tpu_custom_call.1} parent=31 // pred_fallthru
          _
      $region32: #{tpu_custom_call.1} parent=5 // pred_fallthru
        _
      %p863 = scmp.le.s32.totalorder 2, %s33
      // Predicated region
      $region52: #{tpu_custom_call.1} parent=5 // pred_check
        %p864 = pneg %p863
      $region53: #{tpu_custom_call.1} parent=5 // pred_check_branch
        %866 = sbr.rel (%p864) target = $region55
      $region54: #{tpu_custom_call.1} parent=5 // pred_region
        %s867 = ssub.s32 %s33, 2
        // Predicated region
        $region56: #{tpu_custom_call.1} parent=54 // pred_check
          %p868 = pneg %p158
        $region57: #{tpu_custom_call.1} parent=54 // pred_check_branch
          %870 = sbr.rel (%p868) target = $region59
        $region58: #{tpu_custom_call.1} parent=54 // pred_region
          %s871 = sand.u32 %s143, 1
          %s872 = scalar_lea.sflag [#allocation7], %s871
          %s873 = sand.u32 %s143, 1
          %s874 = smul.addr %s873, 8
          %s875 = scalar_lea.vmem [#allocation10], %s874
          %877 = dma.done %s872, 128
        $region59: #{tpu_custom_call.1} parent=54 // pred_fallthru
          _
      $region55: #{tpu_custom_call.1} parent=5 // pred_fallthru
        _
    $region6: #{tpu_custom_call.1} parent=1 // loop_footer
      %s37 = sadd.s32 1, %s33
    $region7: #{tpu_custom_call.1} parent=1 // loop_footer_branch
      %32 = sbr.rel target = $region3
    $region8: #{tpu_custom_call.1} parent=1 // loop_exit
      _
    %878 = vsyncpa [#allocation6], 1
    %s879 = scalar_lea.sflag [#allocation6], 1
    %880 = vsyncpa %s879, 1
    %881 = vsyncpa [#allocation9], 1
    %s882 = scalar_lea.sflag [#allocation9], 1
    %883 = vsyncpa %s882, 1
    %884 = vsyncpa [#allocation7], 1
    %s885 = scalar_lea.sflag [#allocation7], 1
    %886 = vsyncpa %s885, 1

</llo_original>
